<compile_context>
chip_gen: v5e
topology: v5e:2x2
jax: 0.10.0
libtpu: 0.0.40
codegen_flags: <defaults>
</compile_context>

<pallas_src>
import functools

import jax
import jax.numpy as jnp
from jax.experimental import pallas as pl
from jax.experimental.pallas import tpu as pltpu

N_HEADS = 4  # no_of_action_types


def _round_up(n, m):
    return ((n + m - 1) // m) * m


def _policy_kernel(x_ref, w1_ref, b1_ref, w2_ref, b2_ref, w3_ref, b3_ref,
                   w4_ref, b4_ref, out_ref):
    # Trunk: three Linear + ReLU layers (MXU matmuls, VPU max).
    h = jnp.dot(x_ref[...], w1_ref[...], preferred_element_type=jnp.float32)
    h = jnp.maximum(h + b1_ref[...], 0.0)
    h = jnp.dot(h, w2_ref[...], preferred_element_type=jnp.float32)
    h = jnp.maximum(h + b2_ref[...], 0.0)
    h = jnp.dot(h, w3_ref[...], preferred_element_type=jnp.float32)
    h = jnp.maximum(h + b3_ref[...], 0.0)

    # All 4 heads fused into one (h_size, 4*a_size) GEMM + one bias add.
    logits = jnp.dot(h, w4_ref[...], preferred_element_type=jnp.float32)
    logits = logits + b4_ref[...]

    tm, out_f = out_ref.shape
    a_size = out_f // N_HEADS

    # Shared softmax shift: subtracting the global row max is an exact
    # per-head-constant shift (per-head softmax unchanged).  It only loses a
    # head to underflow if that head's logits sit ~87+ below the row max,
    # which this policy never approaches; switch back to per-head maxes if
    # logits could become unbounded.
    z = logits - jnp.max(logits, axis=1, keepdims=True)
    e = jnp.exp(z)                                    # ONE exp for all heads

    # Per-head denominators: exact f32 segmented sums over each 4-lane head
    # group, broadcast back to the head's lanes so normalization is a single
    # reciprocal + multiply + store.
    denom = jnp.concatenate(
        [jnp.broadcast_to(
            jnp.sum(e[:, i * a_size:(i + 1) * a_size], axis=1, keepdims=True),
            (tm, a_size))
         for i in range(N_HEADS)],
        axis=1)
    out_ref[...] = e * pl.reciprocal(denom, approx=False)


def prepare_params(params):
    """One-time conversion of init_params()-style params into kernel layout.

    Flattens head weights (N_HEADS, h, a) -> (h, N_HEADS*a) and biases
    (N_HEADS, 1, a) -> (1, N_HEADS*a), head i in columns [i*a, (i+1)*a).
    Hoisted out of the per-call path so rollouts don't pay an extra
    transpose/reshape dispatch on every forward.
    """
    n_heads, h_size, a_size = params["w4"].shape
    w4 = jnp.transpose(params["w4"], (1, 0, 2)).reshape(h_size,
                                                        n_heads * a_size)
    b4 = params["b4"].reshape(1, n_heads * a_size)
    return dict(w1=params["w1"], b1=params["b1"],
                w2=params["w2"], b2=params["b2"],
                w3=params["w3"], b3=params["b3"],
                w4=w4, b4=b4)


@functools.partial(jax.jit, static_argnames=("block_b",))
def policy_forward(x, kparams, *, block_b=4096):
    """Policy forward pass as a single Pallas kernel.

    Args:
      x: (B, s_size) float32 state batch.
      kparams: output of prepare_params().
      block_b: max batch-tile rows per grid step (multiple of 8).

    Returns:
      (B, N_HEADS * a_size) float32 slab of softmax probabilities; head i is
      out[:, i*a_size:(i+1)*a_size] (lane-dense, no output transpose).
    """
    B, s_size = x.shape
    out_f = kparams["w4"].shape[1]

    # Batch tiling: multiples of 8 rows.  When B is large enough, cap the tile
    # so the grid has >= 2 steps (lets the "parallel" axis use both v7x
    # TensorCores).  Zero-pad B to a tile multiple instead of a full-extent
    # fallback block.
    if B >= 16:
        tm = min(block_b, _round_up(pl.cdiv(B, 2), 8))
    else:
        tm = _round_up(max(B, 1), 8)
    b_pad = _round_up(B, tm)
    if b_pad != B:
        x = jnp.pad(x, ((0, b_pad - B), (0, 0)))
    grid = (b_pad // tm,)

    def full(shape):
        # Weights / biases: full-extent block, resident across the batch grid.
        return pl.BlockSpec(shape, lambda i: (0, 0))

    out = pl.pallas_call(
        _policy_kernel,
        out_shape=jax.ShapeDtypeStruct((b_pad, out_f), jnp.float32),
        grid=grid,
        in_specs=[
            pl.BlockSpec((tm, s_size), lambda i: (i, 0)),
            full(kparams["w1"].shape), full(kparams["b1"].shape),
            full(kparams["w2"].shape), full(kparams["b2"].shape),
            full(kparams["w3"].shape), full(kparams["b3"].shape),
            full(kparams["w4"].shape), full(kparams["b4"].shape),
        ],
        out_specs=pl.BlockSpec((tm, out_f), lambda i: (i, 0)),
        compiler_params=pltpu.CompilerParams(
            dimension_semantics=("parallel",)),
    )(
        x,
        kparams["w1"], kparams["b1"],
        kparams["w2"], kparams["b2"],
        kparams["w3"], kparams["b3"],
        kparams["w4"], kparams["b4"],
    )
    return out[:B] if b_pad != B else out


def init_params(key, s_size, h_size, a_size):
    """Deterministic synthetic init mimicking nn.Linear's U(-1/sqrt(fan_in), +).

    Weights are stored pre-transposed as (in_features, out_features) so the
    kernel computes y = x @ W + b directly on the MXU.
    """
    ks = jax.random.split(key, 8)

    def lin(kw, kb, fan_in, fan_out):
        bound = 1.0 / jnp.sqrt(jnp.float32(fan_in))
        w = jax.random.uniform(kw, (fan_in, fan_out), jnp.float32, -bound, bound)
        b = jax.random.uniform(kb, (1, fan_out), jnp.float32, -bound, bound)
        return w, b

    w1, b1 = lin(ks[0], ks[1], s_size, h_size)
    w2, b2 = lin(ks[2], ks[3], h_size, h_size)
    w3, b3 = lin(ks[4], ks[5], h_size, h_size)

    bound4 = 1.0 / jnp.sqrt(jnp.float32(h_size))
    w4 = jax.random.uniform(ks[6], (N_HEADS, h_size, a_size), jnp.float32,
                            -bound4, bound4)
    b4 = jax.random.uniform(ks[7], (N_HEADS, 1, a_size), jnp.float32,
                            -bound4, bound4)
    return dict(w1=w1, b1=b1, w2=w2, b2=b2, w3=w3, b3=b3, w4=w4, b4=b4)


def _reference_forward(x, p):
    h = jnp.maximum(x @ p["w1"] + p["b1"], 0.0)
    h = jnp.maximum(h @ p["w2"] + p["b2"], 0.0)
    h = jnp.maximum(h @ p["w3"] + p["b3"], 0.0)
    return [jax.nn.softmax(h @ p["w4"][i] + p["b4"][i], axis=1)
            for i in range(N_HEADS)]


# TODO(synk): act()'s Categorical sampling and calculate_loss() are host-side
# RL bookkeeping outside forward() and are not ported to Pallas.

if __name__ == "__main__":
    B, s_size, h_size, a_size = 2, 8, 32, 4

    key = jax.random.PRNGKey(0)
    k_x, k_p, k_x2 = jax.random.split(key, 3)
    x = jax.random.normal(k_x, (B, s_size), jnp.float32)
    params = init_params(k_p, s_size, h_size, a_size)
    kparams = prepare_params(params)       # one-time kernel-layout prep

    probs = jax.block_until_ready(policy_forward(x, kparams))
    assert probs.shape == (B, N_HEADS * a_size)

    ref = _reference_forward(x, params)    # list-of-heads semantics
    for i in range(N_HEADS):
        p = probs[:, i * a_size:(i + 1) * a_size]
        assert jnp.allclose(jnp.sum(p, axis=1), 1.0, atol=1e-5)
        assert jnp.allclose(p, ref[i], atol=1e-5)

    # Exercise the tiled path: non-multiple-of-8 batch, padding, 2 grid steps.
    B2 = 40
    x2 = jax.random.normal(k_x2, (B2, s_size), jnp.float32)
    probs2 = jax.block_until_ready(policy_forward(x2, kparams))
    assert probs2.shape == (B2, N_HEADS * a_size)
    ref2 = _reference_forward(x2, params)
    for i in range(N_HEADS):
        assert jnp.allclose(probs2[:, i * a_size:(i + 1) * a_size],
                            ref2[i], atol=1e-5)

    print("KERNEL_OK")
</pallas_src>

<mosaic_0001>
module attributes {stable_mosaic.version = 11 : i64} {
  func.func @_policy_kernel(%arg0: i32, %arg1: memref<8x8xf32, #tpu.memory_space<vmem>>, %arg2: memref<8x32xf32, #tpu.memory_space<vmem>>, %arg3: memref<1x32xf32, #tpu.memory_space<vmem>>, %arg4: memref<32x32xf32, #tpu.memory_space<vmem>>, %arg5: memref<1x32xf32, #tpu.memory_space<vmem>>, %arg6: memref<32x32xf32, #tpu.memory_space<vmem>>, %arg7: memref<1x32xf32, #tpu.memory_space<vmem>>, %arg8: memref<32x16xf32, #tpu.memory_space<vmem>>, %arg9: memref<1x16xf32, #tpu.memory_space<vmem>>, %arg10: memref<8x16xf32, #tpu.memory_space<vmem>>) attributes {dimension_semantics = [#tpu.dimension_semantics<parallel>], iteration_bounds = array<i64: 1>, scalar_prefetch = 0 : i64, scratch_operands = 0 : i64, tpu.core_type = #tpu.core_type<tc>, window_params = [{transform_indices = @transform_0, window_bounds = array<i64: 8, 8>}, {pipeline_mode = #tpu.pipeline_mode<synchronous>, transform_indices = @transform_1, window_bounds = array<i64: 8, 32>}, {pipeline_mode = #tpu.pipeline_mode<synchronous>, transform_indices = @transform_2, window_bounds = array<i64: 1, 32>}, {pipeline_mode = #tpu.pipeline_mode<synchronous>, transform_indices = @transform_3, window_bounds = array<i64: 32, 32>}, {pipeline_mode = #tpu.pipeline_mode<synchronous>, transform_indices = @transform_4, window_bounds = array<i64: 1, 32>}, {pipeline_mode = #tpu.pipeline_mode<synchronous>, transform_indices = @transform_5, window_bounds = array<i64: 32, 32>}, {pipeline_mode = #tpu.pipeline_mode<synchronous>, transform_indices = @transform_6, window_bounds = array<i64: 1, 32>}, {pipeline_mode = #tpu.pipeline_mode<synchronous>, transform_indices = @transform_7, window_bounds = array<i64: 32, 16>}, {pipeline_mode = #tpu.pipeline_mode<synchronous>, transform_indices = @transform_8, window_bounds = array<i64: 1, 16>}, {transform_indices = @transform_9, window_bounds = array<i64: 8, 16>}]} {
    %c0 = arith.constant 0 : index
    %c0_0 = arith.constant 0 : index
    %0 = vector.load %arg1[%c0, %c0_0] : memref<8x8xf32, #tpu.memory_space<vmem>>, vector<8x8xf32>
    %c0_1 = arith.constant 0 : index
    %c0_2 = arith.constant 0 : index
    %1 = vector.load %arg2[%c0_1, %c0_2] : memref<8x32xf32, #tpu.memory_space<vmem>>, vector<8x32xf32>
    %cst = arith.constant dense<0.000000e+00> : vector<8x32xf32>
    %2 = tpu.matmul %0, %1, %cst {dimension_numbers = #tpu.dot_dimension_numbers<[1], [0], [0], [1], [0, 0, 1, 1], [], []>} : vector<8x8xf32>, vector<8x32xf32>, vector<8x32xf32> -> vector<8x32xf32>
    %c0_3 = arith.constant 0 : index
    %c0_4 = arith.constant 0 : index
    %3 = vector.load %arg3[%c0_3, %c0_4] : memref<1x32xf32, #tpu.memory_space<vmem>>, vector<1x32xf32>
    %4 = vector.broadcast %3 : vector<1x32xf32> to vector<8x32xf32>
    %5 = arith.addf %2, %4 : vector<8x32xf32>
    %cst_5 = arith.constant 0.000000e+00 : f32
    %6 = vector.broadcast %cst_5 : f32 to vector<8x32xf32>
    %7 = arith.maximumf %5, %6 : vector<8x32xf32>
    %c0_6 = arith.constant 0 : index
    %c0_7 = arith.constant 0 : index
    %8 = vector.load %arg4[%c0_6, %c0_7] : memref<32x32xf32, #tpu.memory_space<vmem>>, vector<32x32xf32>
    %cst_8 = arith.constant dense<0.000000e+00> : vector<8x32xf32>
    %9 = tpu.matmul %7, %8, %cst_8 {dimension_numbers = #tpu.dot_dimension_numbers<[1], [0], [0], [1], [0, 0, 1, 1], [], []>} : vector<8x32xf32>, vector<32x32xf32>, vector<8x32xf32> -> vector<8x32xf32>
    %c0_9 = arith.constant 0 : index
    %c0_10 = arith.constant 0 : index
    %10 = vector.load %arg5[%c0_9, %c0_10] : memref<1x32xf32, #tpu.memory_space<vmem>>, vector<1x32xf32>
    %11 = vector.broadcast %10 : vector<1x32xf32> to vector<8x32xf32>
    %12 = arith.addf %9, %11 : vector<8x32xf32>
    %cst_11 = arith.constant 0.000000e+00 : f32
    %13 = vector.broadcast %cst_11 : f32 to vector<8x32xf32>
    %14 = arith.maximumf %12, %13 : vector<8x32xf32>
    %c0_12 = arith.constant 0 : index
    %c0_13 = arith.constant 0 : index
    %15 = vector.load %arg6[%c0_12, %c0_13] : memref<32x32xf32, #tpu.memory_space<vmem>>, vector<32x32xf32>
    %cst_14 = arith.constant dense<0.000000e+00> : vector<8x32xf32>
    %16 = tpu.matmul %14, %15, %cst_14 {dimension_numbers = #tpu.dot_dimension_numbers<[1], [0], [0], [1], [0, 0, 1, 1], [], []>} : vector<8x32xf32>, vector<32x32xf32>, vector<8x32xf32> -> vector<8x32xf32>
    %c0_15 = arith.constant 0 : index
    %c0_16 = arith.constant 0 : index
    %17 = vector.load %arg7[%c0_15, %c0_16] : memref<1x32xf32, #tpu.memory_space<vmem>>, vector<1x32xf32>
    %18 = vector.broadcast %17 : vector<1x32xf32> to vector<8x32xf32>
    %19 = arith.addf %16, %18 : vector<8x32xf32>
    %cst_17 = arith.constant 0.000000e+00 : f32
    %20 = vector.broadcast %cst_17 : f32 to vector<8x32xf32>
    %21 = arith.maximumf %19, %20 : vector<8x32xf32>
    %c0_18 = arith.constant 0 : index
    %c0_19 = arith.constant 0 : index
    %22 = vector.load %arg8[%c0_18, %c0_19] : memref<32x16xf32, #tpu.memory_space<vmem>>, vector<32x16xf32>
    %cst_20 = arith.constant dense<0.000000e+00> : vector<8x16xf32>
    %23 = tpu.matmul %21, %22, %cst_20 {dimension_numbers = #tpu.dot_dimension_numbers<[1], [0], [0], [1], [0, 0, 1, 1], [], []>} : vector<8x32xf32>, vector<32x16xf32>, vector<8x16xf32> -> vector<8x16xf32>
    %c0_21 = arith.constant 0 : index
    %c0_22 = arith.constant 0 : index
    %24 = vector.load %arg9[%c0_21, %c0_22] : memref<1x16xf32, #tpu.memory_space<vmem>>, vector<1x16xf32>
    %25 = vector.broadcast %24 : vector<1x16xf32> to vector<8x16xf32>
    %26 = arith.addf %23, %25 : vector<8x16xf32>
    %cst_23 = arith.constant dense<0xFF800000> : vector<8xf32>
    %27 = vector.multi_reduction <maximumf>, %26, %cst_23 [1] : vector<8x16xf32> to vector<8xf32>
    %28 = vector.shape_cast %27 : vector<8xf32> to vector<8x1xf32>
    %29 = vector.broadcast %28 : vector<8x1xf32> to vector<8x16xf32>
    %30 = arith.subf %26, %29 : vector<8x16xf32>
    %31 = math.exp %30 : vector<8x16xf32>
    %32 = vector.extract_strided_slice %31 {offsets = [0, 0], sizes = [8, 4], strides = [1, 1]} : vector<8x16xf32> to vector<8x4xf32>
    %cst_24 = arith.constant dense<0.000000e+00> : vector<8xf32>
    %33 = vector.multi_reduction <add>, %32, %cst_24 [1] : vector<8x4xf32> to vector<8xf32>
    %34 = vector.shape_cast %33 : vector<8xf32> to vector<8x1xf32>
    %35 = vector.shape_cast %34 : vector<8x1xf32> to vector<8x1xf32>
    %36 = vector.broadcast %35 : vector<8x1xf32> to vector<8x4xf32>
    %37 = vector.extract_strided_slice %31 {offsets = [0, 4], sizes = [8, 4], strides = [1, 1]} : vector<8x16xf32> to vector<8x4xf32>
    %cst_25 = arith.constant dense<0.000000e+00> : vector<8xf32>
    %38 = vector.multi_reduction <add>, %37, %cst_25 [1] : vector<8x4xf32> to vector<8xf32>
    %39 = vector.shape_cast %38 : vector<8xf32> to vector<8x1xf32>
    %40 = vector.shape_cast %39 : vector<8x1xf32> to vector<8x1xf32>
    %41 = vector.broadcast %40 : vector<8x1xf32> to vector<8x4xf32>
    %42 = vector.extract_strided_slice %31 {offsets = [0, 8], sizes = [8, 4], strides = [1, 1]} : vector<8x16xf32> to vector<8x4xf32>
    %cst_26 = arith.constant dense<0.000000e+00> : vector<8xf32>
    %43 = vector.multi_reduction <add>, %42, %cst_26 [1] : vector<8x4xf32> to vector<8xf32>
    %44 = vector.shape_cast %43 : vector<8xf32> to vector<8x1xf32>
    %45 = vector.shape_cast %44 : vector<8x1xf32> to vector<8x1xf32>
    %46 = vector.broadcast %45 : vector<8x1xf32> to vector<8x4xf32>
    %47 = vector.extract_strided_slice %31 {offsets = [0, 12], sizes = [8, 4], strides = [1, 1]} : vector<8x16xf32> to vector<8x4xf32>
    %cst_27 = arith.constant dense<0.000000e+00> : vector<8xf32>
    %48 = vector.multi_reduction <add>, %47, %cst_27 [1] : vector<8x4xf32> to vector<8xf32>
    %49 = vector.shape_cast %48 : vector<8xf32> to vector<8x1xf32>
    %50 = vector.shape_cast %49 : vector<8x1xf32> to vector<8x1xf32>
    %51 = vector.broadcast %50 : vector<8x1xf32> to vector<8x4xf32>
    %52 = tpu.concatenate %36, %41, %46, %51 in 1 : vector<8x4xf32>, vector<8x4xf32>, vector<8x4xf32>, vector<8x4xf32> -> vector<8x16xf32>
    %53 = tpu.reciprocal %52 : vector<8x16xf32> -> vector<8x16xf32>
    %54 = arith.mulf %31, %53 : vector<8x16xf32>
    %c0_28 = arith.constant 0 : index
    %c0_29 = arith.constant 0 : index
    %55 = vector.load %arg10[%c0_28, %c0_29] : memref<8x16xf32, #tpu.memory_space<vmem>>, vector<8x16xf32>
    tpu.vector_store %arg10[%c0_28, %c0_29], %54 {strides = array<i32>} : memref<8x16xf32, #tpu.memory_space<vmem>>, vector<8x16xf32>,
    return
  }
  func.func @transform_0(%arg0: i32) -> (i32, i32) {
    %c0_i32 = arith.constant 0 : i32
    %c0_i32_0 = arith.constant 0 : i32
    return %arg0, %c0_i32 : i32, i32
  }
  func.func @transform_1(%arg0: i32) -> (i32, i32) {
    %c0_i32 = arith.constant 0 : i32
    %c0_i32_0 = arith.constant 0 : i32
    %c0_i32_1 = arith.constant 0 : i32
    return %c0_i32, %c0_i32_0 : i32, i32
  }
  func.func @transform_2(%arg0: i32) -> (i32, i32) {
    %c0_i32 = arith.constant 0 : i32
    %c0_i32_0 = arith.constant 0 : i32
    %c0_i32_1 = arith.constant 0 : i32
    return %c0_i32, %c0_i32_0 : i32, i32
  }
  func.func @transform_3(%arg0: i32) -> (i32, i32) {
    %c0_i32 = arith.constant 0 : i32
    %c0_i32_0 = arith.constant 0 : i32
    %c0_i32_1 = arith.constant 0 : i32
    return %c0_i32, %c0_i32_0 : i32, i32
  }
  func.func @transform_4(%arg0: i32) -> (i32, i32) {
    %c0_i32 = arith.constant 0 : i32
    %c0_i32_0 = arith.constant 0 : i32
    %c0_i32_1 = arith.constant 0 : i32
    return %c0_i32, %c0_i32_0 : i32, i32
  }
  func.func @transform_5(%arg0: i32) -> (i32, i32) {
    %c0_i32 = arith.constant 0 : i32
    %c0_i32_0 = arith.constant 0 : i32
    %c0_i32_1 = arith.constant 0 : i32
    return %c0_i32, %c0_i32_0 : i32, i32
  }
  func.func @transform_6(%arg0: i32) -> (i32, i32) {
    %c0_i32 = arith.constant 0 : i32
    %c0_i32_0 = arith.constant 0 : i32
    %c0_i32_1 = arith.constant 0 : i32
    return %c0_i32, %c0_i32_0 : i32, i32
  }
  func.func @transform_7(%arg0: i32) -> (i32, i32) {
    %c0_i32 = arith.constant 0 : i32
    %c0_i32_0 = arith.constant 0 : i32
    %c0_i32_1 = arith.constant 0 : i32
    return %c0_i32, %c0_i32_0 : i32, i32
  }
  func.func @transform_8(%arg0: i32) -> (i32, i32) {
    %c0_i32 = arith.constant 0 : i32
    %c0_i32_0 = arith.constant 0 : i32
    %c0_i32_1 = arith.constant 0 : i32
    return %c0_i32, %c0_i32_0 : i32, i32
  }
  func.func @transform_9(%arg0: i32) -> (i32, i32) {
    %c0_i32 = arith.constant 0 : i32
    %c0_i32_0 = arith.constant 0 : i32
    return %arg0, %c0_i32 : i32, i32
  }
}

</mosaic_0001>

<llo_original>
// kernel: policy_forward.1
$region0: #{policy_forward.1}
  #allocation0 [shape = 'u32[]', space=smem, size = 0x4, offset = 0x4, fixed_abs, tag = 'smem constant byte address 0x4 - core index']
  #allocation1 [shape = 'u32[72,128]{1,0:T(1,128)}', space=vmem, size = 0x9000, scoped, tag = 'internal scratch']
  %s0 = inlined_call_operand.vmem [shape: f32[8,8], index: 0, kind: input, shape index: {}]
  %s1 = inlined_call_operand.vmem [shape: f32[8,32], index: 1, kind: input, shape index: {}]
  %s2 = inlined_call_operand.vmem [shape: f32[1,32], index: 2, kind: input, shape index: {}]
  %s3 = inlined_call_operand.vmem [shape: f32[32,32], index: 3, kind: input, shape index: {}]
  %s4 = inlined_call_operand.vmem [shape: f32[1,32], index: 4, kind: input, shape index: {}]
  %s5 = inlined_call_operand.hbm [shape: f32[32,32], index: 5, kind: input, shape index: {}]
  %s6 = inlined_call_operand.vmem [shape: f32[1,32], index: 6, kind: input, shape index: {}]
  %s7 = inlined_call_operand.vmem [shape: f32[32,16], index: 7, kind: input, shape index: {}]
  %s8 = inlined_call_operand.vmem [shape: f32[1,16], index: 8, kind: input, shape index: {}]
  %s9 = inlined_call_operand.vmem [shape: f32[8,16], index: 9, kind: output, shape index: {}]
  %s10 = sld [smem:[#allocation0]]
  $region50: #{policy_forward.1} parent=0
    _
  %s12 = ssub.s32 1, %s10
  %s13 = scalar_select 0, %s12, %s10
  $region1: #{policy_forward.1} parent=0
    #allocation2 [shape = 'u8[16384]{0}', space=vmem, size = 0x4000, scoped, tag = 'input window, operand 5, single buffered']
    #allocation3 [shape = 's32[1]{0}', space=sflag, size = 0x4, scoped, tag = 'scoped memory for policy_forward.1']
    %14 = vsyncpa [#allocation3], 0
    // Predicated region
    $region2: #{policy_forward.1} parent=1 // pred_check
      _
    $region3: #{policy_forward.1} parent=1 // pred_check_branch
      %16 = sbr.rel (0) target = $region5
    $region4: #{policy_forward.1} parent=1 // pred_region
      _
    $region5: #{policy_forward.1} parent=1 // pred_fallthru
      _
    // Predicated region
    $region6: #{policy_forward.1} parent=1 // pred_check
      _
    $region7: #{policy_forward.1} parent=1 // pred_check_branch
      %18 = sbr.rel (0) target = $region9
    $region8: #{policy_forward.1} parent=1 // pred_region
      _
    $region9: #{policy_forward.1} parent=1 // pred_fallthru
      _
    // Predicated region
    $region10: #{policy_forward.1} parent=1 // pred_check
      _
    $region11: #{policy_forward.1} parent=1 // pred_check_branch
      %20 = sbr.rel (0) target = $region13
    $region12: #{policy_forward.1} parent=1 // pred_region
      _
    $region13: #{policy_forward.1} parent=1 // pred_fallthru
      _
    // Predicated region
    $region14: #{policy_forward.1} parent=1 // pred_check
      _
    $region15: #{policy_forward.1} parent=1 // pred_check_branch
      %22 = sbr.rel (0) target = $region17
    $region16: #{policy_forward.1} parent=1 // pred_region
      _
    $region17: #{policy_forward.1} parent=1 // pred_fallthru
      _
    // Predicated region
    $region18: #{policy_forward.1} parent=1 // pred_check
      _
    $region19: #{policy_forward.1} parent=1 // pred_check_branch
      %24 = sbr.rel (0) target = $region21
    $region20: #{policy_forward.1} parent=1 // pred_region
      _
    $region21: #{policy_forward.1} parent=1 // pred_fallthru
      _
    // Predicated region
    $region22: #{policy_forward.1} parent=1 // pred_check
      _
    $region23: #{policy_forward.1} parent=1 // pred_check_branch
      %26 = sbr.rel (0) target = $region25
    $region24: #{policy_forward.1} parent=1 // pred_region
      %28 = vsyncadd [#allocation3], 0
      %s29 = sshll.u32 %s5, 4
      %s30 = int_to_ptr.hbm [resolvable:$true] %s29
      %s31 = sshll.u32 [#allocation2], 4
      %s32 = int_to_ptr.vmem [resolvable:$true] %s31
      %37 = dma.hbm_to_vmem [thread:$0]  %s30, 512, %s32, [#allocation3], 128, 128, 8
    $region25: #{policy_forward.1} parent=1 // pred_fallthru
      _
    // Predicated region
    $region26: #{policy_forward.1} parent=1 // pred_check
      _
    $region27: #{policy_forward.1} parent=1 // pred_check_branch
      %39 = sbr.rel (0) target = $region29
    $region28: #{policy_forward.1} parent=1 // pred_region
      _
    $region29: #{policy_forward.1} parent=1 // pred_fallthru
      _
    // Predicated region
    $region30: #{policy_forward.1} parent=1 // pred_check
      _
    $region31: #{policy_forward.1} parent=1 // pred_check_branch
      %41 = sbr.rel (0) target = $region33
    $region32: #{policy_forward.1} parent=1 // pred_region
      _
    $region33: #{policy_forward.1} parent=1 // pred_fallthru
      _
    // Predicated region
    $region34: #{policy_forward.1} parent=1 // pred_check
      _
    $region35: #{policy_forward.1} parent=1 // pred_check_branch
      %43 = sbr.rel (0) target = $region37
    $region36: #{policy_forward.1} parent=1 // pred_region
      _
    $region37: #{policy_forward.1} parent=1 // pred_fallthru
      _
    // Predicated region
    $region38: #{policy_forward.1} parent=1 // pred_check
      _
    $region39: #{policy_forward.1} parent=1 // pred_check_branch
      %45 = sbr.rel (0) target = $region41
    $region40: #{policy_forward.1} parent=1 // pred_region
      %47 = dma.done [#allocation3], 512
    $region41: #{policy_forward.1} parent=1 // pred_fallthru
      _
    %v48 = vld [vmem:[%s0] sm:$0xff]
    %v49 = vld [vmem:[%s1] sm:$0xff]
    %v50 = vld [vmem:[%s2] sm:$0x1]
    %v52 = vperm.slane %v50, 0
    %vm54 = vcmask 64512
    %v56 = vsel %vm54, %v48, 0
    %58 = vmatpush.msra.mxu0 0.0
    %59 = vmatpush.msra.mxu0 0.0
    %60 = vmatpush.msra.mxu0 0.0
    %61 = vmatpush.msra.mxu0 0.0
    %62 = vmatpush.msra.mxu0 0.0
    %63 = vmatpush.msra.mxu0 0.0
    %64 = vmatpush.msra.mxu0 0.0
    %65 = vmatpush.msra.mxu0 0.0
    %66 = vmatpush.msra.mxu0 0.0
    %67 = vmatpush.msra.mxu0 0.0
    %68 = vmatpush.msra.mxu0 0.0
    %69 = vmatpush.msra.mxu0 0.0
    %70 = vmatpush.msra.mxu0 0.0
    %71 = vmatpush.msra.mxu0 0.0
    %72 = vmatpush.msra.mxu0 0.0
    %73 = vmatpush.msra.mxu0 %v49
    %74 = vmatmul.f32.gmra.mxu0 %v56
    %v75 = vpop.f32.mrf.mxu0
    %v76 = vadd.f32 %v52, %v75
    %77 = vdwg.mxu0
    %v78 = vmax.f32 %v76, 0.0
    %v79 = vld [vmem:[%s3] sm:$0xff]
    %v80 = vld [vmem:[%s3 + $0x8] sm:$0xff]
    %v81 = vld [vmem:[%s3 + $0x10] sm:$0xff]
    %v82 = vld [vmem:[%s3 + $0x18] sm:$0xff]
    %v83 = vld [vmem:[%s4] sm:$0x1]
    %v85 = vperm.slane %v83, 0
    %vm87 = vcmask 261120
    %v89 = vsel %vm87, %v78, 0
    %91 = vmatpush.msra.mxu0 0.0
    %92 = vmatpush.msra.mxu0 0.0
    %93 = vmatpush.msra.mxu0 0.0
    %94 = vmatpush.msra.mxu0 0.0
    %95 = vmatpush.msra.mxu0 0.0
    %96 = vmatpush.msra.mxu0 0.0
    %97 = vmatpush.msra.mxu0 0.0
    %98 = vmatpush.msra.mxu0 0.0
    %99 = vmatpush.msra.mxu0 0.0
    %100 = vmatpush.msra.mxu0 0.0
    %101 = vmatpush.msra.mxu0 0.0
    %102 = vmatpush.msra.mxu0 0.0
    %103 = vmatpush.msra.mxu0 %v82
    %104 = vmatpush.msra.mxu0 %v81
    %105 = vmatpush.msra.mxu0 %v80
    %106 = vmatpush.msra.mxu0 %v79
    %107 = vmatmul.f32.gmra.mxu0 %v89
    %v108 = vpop.f32.mrf.mxu0
    %v109 = vadd.f32 %v85, %v108
    %110 = vdwg.mxu0
    %v111 = vmax.f32 %v109, 0.0
    %v112 = vld [vmem:[#allocation2] sm:$0xff]
    %v113 = vld [vmem:[#allocation2 + $0x8] sm:$0xff]
    %v114 = vld [vmem:[#allocation2 + $0x10] sm:$0xff]
    %v115 = vld [vmem:[#allocation2 + $0x18] sm:$0xff]
    %v116 = vld [vmem:[%s6] sm:$0x1]
    %v118 = vperm.slane %v116, 0
    %v121 = vsel %vm87, %v111, 0
    %123 = vmatpush.msra.mxu0 0.0
    %124 = vmatpush.msra.mxu0 0.0
    %125 = vmatpush.msra.mxu0 0.0
    %126 = vmatpush.msra.mxu0 0.0
    %127 = vmatpush.msra.mxu0 0.0
    %128 = vmatpush.msra.mxu0 0.0
    %129 = vmatpush.msra.mxu0 0.0
    %130 = vmatpush.msra.mxu0 0.0
    %131 = vmatpush.msra.mxu0 0.0
    %132 = vmatpush.msra.mxu0 0.0
    %133 = vmatpush.msra.mxu0 0.0
    %134 = vmatpush.msra.mxu0 0.0
    %135 = vmatpush.msra.mxu0 %v115
    %136 = vmatpush.msra.mxu0 %v114
    %137 = vmatpush.msra.mxu0 %v113
    %138 = vmatpush.msra.mxu0 %v112
    %139 = vmatmul.f32.gmra.mxu0 %v121
    %v140 = vpop.f32.mrf.mxu0
    %v141 = vadd.f32 %v118, %v140
    %142 = vdwg.mxu0
    %v143 = vmax.f32 %v141, 0.0
    %v144 = vld [vmem:[%s7] sm:$0xff]
    %v145 = vld [vmem:[%s7 + $0x8] sm:$0xff]
    %v146 = vld [vmem:[%s7 + $0x10] sm:$0xff]
    %v147 = vld [vmem:[%s7 + $0x18] sm:$0xff]
    %v148 = vld [vmem:[%s8] sm:$0x1]
    %v150 = vperm.slane %v148, 0
    %v153 = vsel %vm87, %v143, 0
    %155 = vmatpush.msra.mxu0 0.0
    %156 = vmatpush.msra.mxu0 0.0
    %157 = vmatpush.msra.mxu0 0.0
    %158 = vmatpush.msra.mxu0 0.0
    %159 = vmatpush.msra.mxu0 0.0
    %160 = vmatpush.msra.mxu0 0.0
    %161 = vmatpush.msra.mxu0 0.0
    %162 = vmatpush.msra.mxu0 0.0
    %163 = vmatpush.msra.mxu0 0.0
    %164 = vmatpush.msra.mxu0 0.0
    %165 = vmatpush.msra.mxu0 0.0
    %166 = vmatpush.msra.mxu0 0.0
    %167 = vmatpush.msra.mxu0 %v147
    %168 = vmatpush.msra.mxu0 %v146
    %169 = vmatpush.msra.mxu0 %v145
    %170 = vmatpush.msra.mxu0 %v144
    %171 = vmatmul.f32.gmra.mxu0 %v153
    %v172 = vpop.f32.mrf.mxu0
    %v173 = vadd.f32 %v150, %v172
    %174 = vdwg.mxu0
    %vm175 = vcmask 130048
    %v176 = vsel %vm175, %v173, -inf
    %177 = vmax.xlane.f32.xlu0 %v176
    %v178 = vpop.xlane.xlu0 %177
    %v179 = vsub.f32 %v173, %v178
    %v180 = vmul.f32 %v179, 1.442695
    %v181 = vpow.pop %v180
    %vm182 = vcmask 31744
    %v183 = vsel %vm182, %v181, 0.0
    %184 = vadd.xlane.f32.xlu0 %v183
    %v185 = vpop.xlane.xlu0 %184
    %187 = vrot.lane.b32.xlu0 %v181, 124
    %v188 = vpop.permute.xlu0 %187
    %v190 = vsel %vm182, %v188, 0.0
    %191 = vadd.xlane.f32.xlu0 %v190
    %v192 = vpop.xlane.xlu0 %191
    %193 = vrot.lane.b32.xlu0 %v181, 120
    %v194 = vpop.permute.xlu0 %193
    %v196 = vsel %vm182, %v194, 0.0
    %197 = vadd.xlane.f32.xlu0 %v196
    %v198 = vpop.xlane.xlu0 %197
    %199 = vrot.lane.b32.xlu0 %v181, 116
    %v200 = vpop.permute.xlu0 %199
    %v202 = vsel %vm182, %v200, 0.0
    %203 = vadd.xlane.f32.xlu0 %v202
    %v204 = vpop.xlane.xlu0 %203
    %v205 = vsel %vm182, %v185, %v192
    %v206 = vsel %vm54, %v205, %v198
    %vm207 = vcmask 97280
    %v208 = vsel %vm207, %v206, %v204
    %v209 = vrcp.pop %v208
    %v210 = vmul.f32 %v208, %v209
    %v211 = vsub.f32 1.0, %v210
    %v212 = vmul.f32 %v209, %v211
    %v213 = vadd.f32 %v209, %v212
    %vm214 = vweird.f32 %v208
    %vm215 = vweird.f32 %v209
    %vm216 = vmor %vm214, %vm215
    %v217 = vsel %vm216, %v209, %v213
    %v218 = vand.u32 2147483647, %v208
    %vm219 = vcmp.eq.f32.partialorder %v218, 8.507059e+37
    %v220 = vand.u32 %v208, 2147483648
    %v221 = vor.u32 1.1754944e-38, %v220
    %v222 = vsel %vm219, %v221, %v217
    %v223 = vmul.f32 %v181, %v222
    %224 = vst.msk [vmem:[%s9] sm:$0xff] %vm175, %v223
    // Predicated region
    $region42: #{policy_forward.1} parent=1 // pred_check
      _
    $region43: #{policy_forward.1} parent=1 // pred_check_branch
      %226 = sbr.rel (0) target = $region45
    $region44: #{policy_forward.1} parent=1 // pred_region
      _
    $region45: #{policy_forward.1} parent=1 // pred_fallthru
      _
    // Predicated region
    $region46: #{policy_forward.1} parent=1 // pred_check
      _
    $region47: #{policy_forward.1} parent=1 // pred_check_branch
      %228 = sbr.rel (0) target = $region49
    $region48: #{policy_forward.1} parent=1 // pred_region
      _
    $region49: #{policy_forward.1} parent=1 // pred_fallthru
      _
    %229 = vsyncpa [#allocation3], 1

</llo_original>
